<compile_context>
chip_gen: v5e
topology: v5e:2x2
jax: 0.10.0
libtpu: 0.0.40
codegen_flags: <defaults>
</compile_context>

<pallas_src>
import functools

import numpy as np
import jax
import jax.numpy as jnp
from jax.experimental import pallas as pl
from jax.experimental.pallas import tpu as pltpu


# ---------------------------------------------------------------------------
# Deterministic buffer construction (mirrors Resonance.__init__ shapes)
# ---------------------------------------------------------------------------
def musical_scale_hz(start_midi: int, stop_midi: int, n_steps: int) -> np.ndarray:
    midi = np.linspace(start_midi, stop_midi, n_steps)
    return 440.0 * 2.0 ** ((midi - 69.0) / 12.0)


def make_waves(n_samples: int, f0s: np.ndarray, samplerate: int) -> np.ndarray:
    # TODO(synk): the original make_waves may band-limit harmonics; here we
    # build plain sine / sawtooth / square / triangle per f0 (same buffer shape).
    t = np.arange(n_samples, dtype=np.float64) / float(samplerate)
    waves = []
    for f0 in f0s:
        phase = 2.0 * np.pi * f0 * t
        frac = f0 * t - np.floor(0.5 + f0 * t)          # in [-0.5, 0.5)
        sine = np.sin(phase)
        saw = 2.0 * frac
        square = np.sign(np.sin(phase))
        tri = 2.0 * np.abs(saw) - 1.0
        waves.extend([sine, saw, square, tri])
    return np.stack(waves).astype(np.float32)            # (n_resonances, n_samples)


# ---------------------------------------------------------------------------
# Helpers
# ---------------------------------------------------------------------------
def _largest_divisor_tile(dim: int, max_tile: int, align: int) -> int:
    """Largest t <= max_tile with t % align == 0 and dim % t == 0, else dim."""
    if dim <= max_tile:
        return dim
    t = (max_tile // align) * align
    while t >= align:
        if dim % t == 0:
            return t
        t -= align
    return dim  # fall back to a single (full) block


def _vmem_budget_bytes() -> int:
    """Generation-aware VMEM budget: ~75% of physical capacity.

    v5e/v6e (128 MiB) -> ~96 MiB, v7x (64 MiB) -> ~48 MiB.  Falls back to a
    conservative 48 MiB if the hardware query is unavailable.
    """
    cap = 0
    try:
        info = pltpu.get_tpu_info()
        cap = int(getattr(info, "vmem_capacity_bytes", 0) or 0)
    except Exception:
        cap = 0
    if cap <= 0:
        cap = 64 * 1024 * 1024
    return int(cap * 0.75)


# ---------------------------------------------------------------------------
# hard_choice=True: pure HBM->HBM DMA row gather (one-hot matmul == row select)
# ---------------------------------------------------------------------------
_GATHER_SLOTS = 8   # outstanding row DMAs in the ring


def _gather_dma_kernel(idx_ref, waves_hbm, out_hbm, sem, *, n_rows: int):
    """out[i, :] = waves[idx[i], :] via a ring of HBM->HBM row DMAs.

    No VMEM staging and no vector load/store work — HBM bandwidth is the only
    limiter, and there is no per-row grid-step overhead.
    """

    def _copy(row, slot):
        return pltpu.make_async_copy(
            waves_hbm.at[pl.ds(idx_ref[row], 1), :],
            out_hbm.at[pl.ds(row, 1), :],
            sem.at[slot])

    n_prime = min(_GATHER_SLOTS, n_rows)

    # Prime the ring.
    @pl.loop(0, n_prime)
    def _(i):
        _copy(i, i % _GATHER_SLOTS).start()

    # Drain each row in order; refill the freed slot.
    @pl.loop(0, n_rows)
    def _(i):
        slot = i % _GATHER_SLOTS
        _copy(i, slot).wait()

        @pl.when(i + _GATHER_SLOTS < n_rows)
        def _():
            _copy(i + _GATHER_SLOTS, slot).start()


def _resonance_hard(choice_2d: jax.Array, waves: jax.Array) -> jax.Array:
    m, n_res = choice_2d.shape
    n_res_w, n_samples = waves.shape
    assert n_res == n_res_w

    # Tiny wrapper-side compute: M*R argmax (first occurrence on ties).
    idx = jnp.argmax(choice_2d, axis=-1).astype(jnp.int32)          # (M,)

    itemsize = int(np.dtype(waves.dtype).itemsize)
    cost = pl.CostEstimate(
        flops=0,
        transcendentals=0,
        bytes_accessed=int(2 * m * n_samples * itemsize + m * 4),
    )

    kernel = functools.partial(_gather_dma_kernel, n_rows=m)

    out = pl.pallas_call(
        kernel,
        out_shape=jax.ShapeDtypeStruct((m, n_samples), waves.dtype),
        grid_spec=pltpu.PrefetchScalarGridSpec(
            num_scalar_prefetch=1,                       # idx -> SMEM
            grid=(1,),
            in_specs=[pl.BlockSpec(memory_space=pl.ANY)],   # waves stays in HBM
            out_specs=pl.BlockSpec(memory_space=pl.ANY),    # written by DMA only
            scratch_shapes=[pltpu.SemaphoreType.DMA((_GATHER_SLOTS,))]),
        compiler_params=pltpu.CompilerParams(
            dimension_semantics=("arbitrary",),
            vmem_limit_bytes=_vmem_budget_bytes()),
        cost_estimate=cost,
    )(idx, waves)

    return out


# ---------------------------------------------------------------------------
# hard_choice=False (relu) or callable activation: waves-stationary MXU matmul
# ---------------------------------------------------------------------------
def _matmul_kernel(acts_ref, waves_ref, out_ref):
    # Activation / dtype cast are applied once in the wrapper; the body is a
    # pure MXU matmul with f32 accumulation.
    out_ref[...] = jnp.dot(acts_ref[...], waves_ref[...],
                           preferred_element_type=jnp.float32
                           ).astype(out_ref.dtype)


def _resonance_matmul(acts_2d: jax.Array, waves: jax.Array, *,
                      compute_dtype=jnp.bfloat16,
                      tm_max: int = 256, tn_max: int = 2048) -> jax.Array:
    m, n_res = acts_2d.shape
    n_res_w, n_samples = waves.shape
    assert n_res == n_res_w

    # compute_dtype=bfloat16 (default) halves waves HBM traffic and VMEM use;
    # fp32 opt-in keeps the output bit-exact vs. the reference.
    acts_c = acts_2d.astype(compute_dtype)
    waves_c = waves.astype(compute_dtype)
    in_itemsize = int(np.dtype(compute_dtype).itemsize)

    vmem_budget = _vmem_budget_bytes()

    tm = _largest_divisor_tile(m, tm_max, 8)              # sublane-aligned M tile
    tn = _largest_divisor_tile(n_samples, tn_max, 128)    # lane-dense N tile

    def footprint(tm_, tn_):
        # Double-buffered input / output blocks.
        return 2 * (tm_ * n_res * in_itemsize
                    + n_res * tn_ * in_itemsize
                    + tm_ * tn_ * 4)

    # Shrink the lane tile (then the M tile) until the pipeline fits the VMEM
    # budget — guards the un-tiled K dimension on v7x's 64 MiB VMEM.
    # TODO(synk): for very large n_res, tile K with an f32 VMEM accumulator.
    while footprint(tm, tn) > vmem_budget and tn > 128:
        new_tn = _largest_divisor_tile(n_samples, tn // 2, 128)
        if new_tn >= tn:
            break
        tn = new_tn
    while footprint(tm, tn) > vmem_budget and tm > 8:
        new_tm = _largest_divisor_tile(m, tm // 2, 8)
        if new_tm >= tm:
            break
        tm = new_tm

    grid_j = n_samples // tn      # lane tiles (outer, "parallel" -> megacore)
    grid_i = m // tm              # M tiles (inner)

    cost = pl.CostEstimate(
        flops=int(2 * m * n_res * n_samples),
        transcendentals=0,
        bytes_accessed=int(n_res * n_samples * in_itemsize      # waves: read once
                           + grid_j * m * n_res * in_itemsize   # acts: per lane tile
                           + m * n_samples * 4),                # output
    )

    out_2d = pl.pallas_call(
        _matmul_kernel,
        out_shape=jax.ShapeDtypeStruct((m, n_samples), jnp.float32),
        grid_spec=pltpu.PrefetchScalarGridSpec(
            num_scalar_prefetch=0,
            # Waves-stationary: j (lane tiles) outer, i (M tiles) inner.  The
            # waves block index (0, j) is constant across the inner i sweep, so
            # the large waves operand is DMA'd from HBM exactly once; the tiny
            # acts operand is re-streamed instead.
            grid=(grid_j, grid_i),
            in_specs=[
                pl.BlockSpec((tm, n_res), lambda j, i: (i, 0)),
                pl.BlockSpec((n_res, tn), lambda j, i: (0, j)),
            ],
            out_specs=pl.BlockSpec((tm, tn), lambda j, i: (i, j)),
        ),
        compiler_params=pltpu.CompilerParams(
            dimension_semantics=("parallel", "parallel"),
            vmem_limit_bytes=vmem_budget),
        cost_estimate=cost,
    )(acts_c, waves_c)

    return out_2d


# ---------------------------------------------------------------------------
# Public forward (matches Resonance.forward)
# ---------------------------------------------------------------------------
def resonance_forward(choice: jax.Array, waves: jax.Array, *,
                      hard_choice=True,
                      compute_dtype=jnp.bfloat16) -> jax.Array:
    batch, n_events, n_res = choice.shape
    n_res_w, n_samples = waves.shape
    assert n_res == n_res_w

    m = batch * n_events

    if callable(hard_choice):
        acts = hard_choice(choice).reshape(m, n_res).astype(jnp.float32)
        out_2d = _resonance_matmul(acts, waves, compute_dtype=compute_dtype)
    elif hard_choice:
        choice_2d = choice.reshape(m, n_res).astype(jnp.float32)
        out_2d = _resonance_hard(choice_2d, waves)
    else:
        # relu hoisted out of the kernel: applied once here on the tiny
        # (M, R) activations instead of per lane tile inside the matmul body.
        acts = jnp.maximum(choice.reshape(m, n_res).astype(jnp.float32), 0.0)
        out_2d = _resonance_matmul(acts, waves, compute_dtype=compute_dtype)

    return out_2d.reshape(batch, n_events, n_samples).astype(jnp.float32)


# ---------------------------------------------------------------------------
# Reference (pure JAX) for a sanity check
# ---------------------------------------------------------------------------
def resonance_ref(choice, waves, hard_choice=True):
    if callable(hard_choice):
        acts = hard_choice(choice)
    elif hard_choice:
        idx = jnp.argmax(choice, axis=-1)
        acts = jax.nn.one_hot(idx, choice.shape[-1], dtype=jnp.float32)
    else:
        acts = jnp.maximum(choice, 0.0)
    return jnp.einsum("ber,rn->ben", acts, waves)


if __name__ == "__main__":
    # Small config consistent with the module.
    n_resonances = 16           # n_steps = n_resonances // 4 = 4 f0s
    n_samples = 256
    samplerate = 22050
    batch, n_events = 2, 8

    f0s = musical_scale_hz(start_midi=21, stop_midi=106,
                           n_steps=n_resonances // 4)
    waves_np = make_waves(n_samples, f0s, samplerate)     # (16, 256)
    waves = jnp.asarray(waves_np)                          # buffer (view of (1,R,N))

    key = jax.random.PRNGKey(0)
    choice = jax.random.normal(key, (batch, n_events, n_resonances),
                               dtype=jnp.float32)

    # hard_choice=True path (module default): pure HBM->HBM DMA row gather.
    out_hard = jax.block_until_ready(
        resonance_forward(choice, waves, hard_choice=True))
    ref_hard = resonance_ref(choice, waves, hard_choice=True)
    assert out_hard.shape == (batch, n_events, n_samples)
    np.testing.assert_allclose(np.asarray(out_hard), np.asarray(ref_hard),
                               rtol=1e-5, atol=1e-5)

    # hard_choice=False path, fp32 compute: bit-exact-ish check vs reference.
    out_soft_f32 = jax.block_until_ready(
        resonance_forward(choice, waves, hard_choice=False,
                          compute_dtype=jnp.float32))
    ref_soft = resonance_ref(choice, waves, hard_choice=False)
    np.testing.assert_allclose(np.asarray(out_soft_f32), np.asarray(ref_soft),
                               rtol=1e-5, atol=1e-5)

    # hard_choice=False path, default bf16 streaming (halved waves HBM traffic).
    out_soft_bf16 = jax.block_until_ready(
        resonance_forward(choice, waves, hard_choice=False))
    np.testing.assert_allclose(np.asarray(out_soft_bf16), np.asarray(ref_soft),
                               rtol=5e-2, atol=1e-1)

    print("KERNEL_OK")
</pallas_src>

<mosaic_0001>
module attributes {stable_mosaic.version = 11 : i64} {
  func.func @_gather_dma_kernel(%arg0: i32, %arg1: memref<16xi32, #tpu.memory_space<smem>>, %arg2: memref<16x256xf32, #tpu.memory_space<any>>, %arg3: memref<16x256xf32, #tpu.memory_space<any>>, %arg4: memref<8x!tpu.dma_semaphore, #tpu.memory_space<semaphore_mem>>) attributes {dimension_semantics = [#tpu.dimension_semantics<arbitrary>], iteration_bounds = array<i64: 1>, scalar_prefetch = 1 : i64, scratch_operands = 1 : i64, tpu.core_type = #tpu.core_type<tc>, window_params = [{}, {}]} {
    %c0_i32 = arith.constant 0 : i32
    %c8_i32 = arith.constant 8 : i32
    %0 = arith.addi %c0_i32, %c8_i32 : i32
    %c1_i32 = arith.constant 1 : i32
    scf.for %arg5 = %c0_i32 to %0 step %c1_i32  : i32 {
      %c1_i32_4 = arith.constant 1 : i32
      %2 = arith.muli %arg5, %c1_i32_4 : i32
      %c0_i32_5 = arith.constant 0 : i32
      %3 = arith.addi %c0_i32_5, %2 : i32
      %c8_i32_6 = arith.constant 8 : i32
      %c0_i32_7 = arith.constant 0 : i32
      %4 = arith.cmpi eq, %c8_i32_6, %c0_i32_7 : i32
      %c1_i32_8 = arith.constant 1 : i32
      %5 = arith.select %4, %c1_i32_8, %c8_i32_6 : i32
      %6 = arith.remsi %3, %5 : i32
      %c0_i32_9 = arith.constant 0 : i32
      %7 = arith.cmpi ne, %6, %c0_i32_9 : i32
      %c0_i32_10 = arith.constant 0 : i32
      %8 = arith.cmpi slt, %6, %c0_i32_10 : i32
      %c0_i32_11 = arith.constant 0 : i32
      %9 = arith.cmpi slt, %5, %c0_i32_11 : i32
      %10 = arith.xori %8, %9 : i1
      %11 = arith.andi %10, %7 : i1
      %12 = arith.addi %6, %5 : i32
      %13 = arith.select %11, %12, %6 : i32
      %14 = arith.index_cast %3 : i32 to index
      %15 = memref.load %arg1[%14] : memref<16xi32, #tpu.memory_space<smem>>
      %c0_i32_12 = arith.constant 0 : i32
      %16 = tpu.memref_slice %arg2[%15, %c0_i32_12] : memref<16x256xf32, #tpu.memory_space<any>> -> memref<1x256xf32, #tpu.memory_space<any>>
      %c0_i32_13 = arith.constant 0 : i32
      %17 = tpu.memref_slice %arg3[%3, %c0_i32_13] : memref<16x256xf32, #tpu.memory_space<any>> -> memref<1x256xf32, #tpu.memory_space<any>>
      %18 = tpu.memref_slice %arg4[%13] : memref<8x!tpu.dma_semaphore, #tpu.memory_space<semaphore_mem>> -> memref<1x!tpu.dma_semaphore, #tpu.memory_space<semaphore_mem>>
      %19 = tpu.memref_squeeze %18 : memref<1x!tpu.dma_semaphore, #tpu.memory_space<semaphore_mem>> -> memref<!tpu.dma_semaphore, #tpu.memory_space<semaphore_mem>>
      tpu.enqueue_dma source(%16 : memref<1x256xf32, #tpu.memory_space<any>>) target(%17 : memref<1x256xf32, #tpu.memory_space<any>>) target_semaphore(%19 : memref<!tpu.dma_semaphore, #tpu.memory_space<semaphore_mem>>)
    }
    %c8_i32_0 = arith.constant 8 : i32
    %c0_i32_1 = arith.constant 0 : i32
    %c16_i32 = arith.constant 16 : i32
    %1 = arith.addi %c0_i32_1, %c16_i32 : i32
    %c1_i32_2 = arith.constant 1 : i32
    scf.for %arg5 = %c0_i32_1 to %1 step %c1_i32_2  : i32 {
      %c1_i32_4 = arith.constant 1 : i32
      %2 = arith.muli %arg5, %c1_i32_4 : i32
      %c0_i32_5 = arith.constant 0 : i32
      %3 = arith.addi %c0_i32_5, %2 : i32
      %c8_i32_6 = arith.constant 8 : i32
      %c0_i32_7 = arith.constant 0 : i32
      %4 = arith.cmpi eq, %c8_i32_6, %c0_i32_7 : i32
      %c1_i32_8 = arith.constant 1 : i32
      %5 = arith.select %4, %c1_i32_8, %c8_i32_6 : i32
      %6 = arith.remsi %3, %5 : i32
      %c0_i32_9 = arith.constant 0 : i32
      %7 = arith.cmpi ne, %6, %c0_i32_9 : i32
      %c0_i32_10 = arith.constant 0 : i32
      %8 = arith.cmpi slt, %6, %c0_i32_10 : i32
      %c0_i32_11 = arith.constant 0 : i32
      %9 = arith.cmpi slt, %5, %c0_i32_11 : i32
      %10 = arith.xori %8, %9 : i1
      %11 = arith.andi %10, %7 : i1
      %12 = arith.addi %6, %5 : i32
      %13 = arith.select %11, %12, %6 : i32
      %14 = arith.index_cast %3 : i32 to index
      %15 = memref.load %arg1[%14] : memref<16xi32, #tpu.memory_space<smem>>
      %c0_i32_12 = arith.constant 0 : i32
      %16 = tpu.memref_slice %arg2[%15, %c0_i32_12] : memref<16x256xf32, #tpu.memory_space<any>> -> memref<1x256xf32, #tpu.memory_space<any>>
      %c0_i32_13 = arith.constant 0 : i32
      %17 = tpu.memref_slice %arg3[%3, %c0_i32_13] : memref<16x256xf32, #tpu.memory_space<any>> -> memref<1x256xf32, #tpu.memory_space<any>>
      %18 = tpu.memref_slice %arg4[%13] : memref<8x!tpu.dma_semaphore, #tpu.memory_space<semaphore_mem>> -> memref<1x!tpu.dma_semaphore, #tpu.memory_space<semaphore_mem>>
      %19 = tpu.memref_squeeze %18 : memref<1x!tpu.dma_semaphore, #tpu.memory_space<semaphore_mem>> -> memref<!tpu.dma_semaphore, #tpu.memory_space<semaphore_mem>>
      tpu.wait_dma2 semaphore(%19 : memref<!tpu.dma_semaphore, #tpu.memory_space<semaphore_mem>>) src(%16 : memref<1x256xf32, #tpu.memory_space<any>>) dst(%17 : memref<1x256xf32, #tpu.memory_space<any>>)
      %c8_i32_14 = arith.constant 8 : i32
      %20 = arith.addi %3, %c8_i32_14 : i32
      %c16_i32_15 = arith.constant 16 : i32
      %21 = arith.cmpi slt, %20, %c16_i32_15 : i32
      %22 = arith.extui %21 : i1 to i32
      %c0_i32_16 = arith.constant 0 : i32
      %23 = arith.cmpi ne, %22, %c0_i32_16 : i32
      scf.if %23 {
        %c8_i32_17 = arith.constant 8 : i32
        %24 = arith.addi %3, %c8_i32_17 : i32
        %25 = arith.index_cast %24 : i32 to index
        %26 = memref.load %arg1[%25] : memref<16xi32, #tpu.memory_space<smem>>
        %c0_i32_18 = arith.constant 0 : i32
        %27 = tpu.memref_slice %arg2[%26, %c0_i32_18] : memref<16x256xf32, #tpu.memory_space<any>> -> memref<1x256xf32, #tpu.memory_space<any>>
        %c0_i32_19 = arith.constant 0 : i32
        %28 = tpu.memref_slice %arg3[%24, %c0_i32_19] : memref<16x256xf32, #tpu.memory_space<any>> -> memref<1x256xf32, #tpu.memory_space<any>>
        %29 = tpu.memref_slice %arg4[%13] : memref<8x!tpu.dma_semaphore, #tpu.memory_space<semaphore_mem>> -> memref<1x!tpu.dma_semaphore, #tpu.memory_space<semaphore_mem>>
        %30 = tpu.memref_squeeze %29 : memref<1x!tpu.dma_semaphore, #tpu.memory_space<semaphore_mem>> -> memref<!tpu.dma_semaphore, #tpu.memory_space<semaphore_mem>>
        tpu.enqueue_dma source(%27 : memref<1x256xf32, #tpu.memory_space<any>>) target(%28 : memref<1x256xf32, #tpu.memory_space<any>>) target_semaphore(%30 : memref<!tpu.dma_semaphore, #tpu.memory_space<semaphore_mem>>)
      } else {
      }
    }
    %c16_i32_3 = arith.constant 16 : i32
    return
  }
}

</mosaic_0001>

<llo_original>
// kernel: tpu_custom_call.1
$region0: #{tpu_custom_call.1}
  #allocation0 [shape = 'u32[]', space=smem, size = 0x4, offset = 0x4, fixed_abs, tag = 'smem constant byte address 0x4 - core index']
  #allocation1 [shape = 'u32[72,128]{1,0:T(1,128)}', space=vmem, size = 0x9000, scoped, tag = 'internal scratch']
  #allocation2 [shape = 's32[8]{0}', space=sflag, size = 0x20, scoped, tag = 'scratch operand']
  #allocation3 [shape = 's32[1]{0}', space=sflag, size = 0x4, scoped, tag = 'scoped memory for tpu_custom_call.1']
  #allocation4 [shape = 'u8[512]{0}', space=smem, size = 0x200, scoped, tag = 'prefetched SMEM operand 0']
  #allocation5 [shape = 's32[]', space=sflag, size = 0x4, offset = 0, fixed_abs, tag = 'sflag constant byte address 0x0 - dummy sync flag']
  #allocation7 [shape = 's32[]', space=sflag, size = 0x4, offset = 0, fixed_abs, tag = 'sflag constant byte address 0x0 - dummy sync flag']
  %s0 = inlined_call_operand.hbm [shape: s32[16], index: 0, kind: input, shape index: {}]
  %s1 = inlined_call_operand.hbm [shape: f32[16,256], index: 1, kind: input, shape index: {}]
  %s2 = inlined_call_operand.hbm [shape: f32[16,256], index: 2, kind: output, shape index: {}]
  %s3 = sld [smem:[#allocation0]]
  $region20: #{tpu_custom_call.1} parent=0
    _
  %s5 = ssub.s32 1, %s3
  %s6 = scalar_select 0, %s5, %s3
  %s8 = sshll.u32 %s0, 4
  %s9 = int_to_ptr.hbm [resolvable:$true] %s8
  %11 = dma.hbm_to_smem %s9, 16, [#allocation4], [#allocation3]
  %13 = dma.done [#allocation3], 16
  %14 = sfence
  loop: start=0, step=1, limit=8
  $region2: #{tpu_custom_call.1} parent=0 // loop_pre_header
    _
  $region3: #{tpu_custom_call.1} parent=0 // loop_header
    %s16 = sphi 0, %s20
    %p17 = scmp.ge.s32.totalorder %s16, 8
  $region4: #{tpu_custom_call.1} parent=0 // loop_header_branch
    %19 = sbr.rel (%p17) target = $region8
  $region5: #{tpu_custom_call.1} parent=0 // loop_body
    #allocation6 [shape = 'u32[3]{0}', space=smem, size = 0xc, scoped, tag = 'DMA stride descriptor']
    %p21 = scmp.lt.s32.totalorder %s16, 0
    %s22 = ssub.s32 0, %s16
    %s23 = scalar_select %p21, %s22, %s16
    %s24 = sand.u32 %s23, 7
    %s25 = ssub.s32 0, %s24
    %s26 = scalar_select %p21, %s25, %s24
    %p27 = scmp.ne.s32.totalorder %s26, 0
    %p28 = scmp.lt.s32.totalorder %s26, 0
    %p29 = pnand %p28, %p27
    %p30 = pneg %p29
    %s31 = sadd.s32 %s26, 8
    %s32 = scalar_select %p30, %s31, %s26
    %s33 = sld [smem:[#allocation4 + %s16]]
    %s34 = sshrl.u32 %s33, 3
    %s35 = sand.u32 %s33, 7
    %s36 = smul.u32 %s34, 16
    %s37 = sadd.s32 %s35, %s36
    %s38 = scalar_lea.hbm %s1, %s37
    %s39 = sshrl.u32 %s16, 3
    %s40 = sand.u32 %s16, 7
    %s41 = smul.u32 %s39, 16
    %s42 = sadd.s32 %s40, %s41
    %s43 = scalar_lea.hbm %s2, %s42
    %s44 = scalar_lea.sflag [#allocation2], %s32
    %s46 = sshll.u32 1, 14
    %s47 = sxor.u32 4294967295, %s46
    %s49 = sshll.u32 %s38, 4
    %s50 = int_to_ptr.hbm [resolvable:$true] %s49
    %s51 = sshll.u32 %s43, 4
    %s52 = int_to_ptr.hbm [resolvable:$true] %s51
    %56 = sst [smem:[#allocation6]] 128
    %s57 = scalar_lea.smem [#allocation6], 1
    %58 = sst [smem:[%s57]] 128
    %s59 = scalar_lea.smem [#allocation6], 2
    %60 = sst [smem:[%s59]] 1
    %62 = dma.general %s50, 32, %s52, %s44, [#allocation5], [#allocation6], 0, 0
  $region6: #{tpu_custom_call.1} parent=0 // loop_footer
    %s20 = sadd.s32 1, %s16
  $region7: #{tpu_custom_call.1} parent=0 // loop_footer_branch
    %15 = sbr.rel target = $region3
  $region8: #{tpu_custom_call.1} parent=0 // loop_exit
    _
  loop: start=0, step=1, limit=16
  $region9: #{tpu_custom_call.1} parent=0 // loop_pre_header
    _
  $region10: #{tpu_custom_call.1} parent=0 // loop_header
    %s64 = sphi 0, %s68
    %p65 = scmp.ge.s32.totalorder %s64, 16
  $region11: #{tpu_custom_call.1} parent=0 // loop_header_branch
    %67 = sbr.rel (%p65) target = $region15
  $region12: #{tpu_custom_call.1} parent=0 // loop_body
    %p69 = scmp.lt.s32.totalorder %s64, 0
    %s70 = ssub.s32 0, %s64
    %s71 = scalar_select %p69, %s70, %s64
    %s72 = sand.u32 %s71, 7
    %s73 = ssub.s32 0, %s72
    %s74 = scalar_select %p69, %s73, %s72
    %p75 = scmp.ne.s32.totalorder %s74, 0
    %p76 = scmp.lt.s32.totalorder %s74, 0
    %p77 = pnand %p76, %p75
    %p78 = pneg %p77
    %s79 = sadd.s32 %s74, 8
    %s80 = scalar_select %p78, %s79, %s74
    %s81 = sld [smem:[#allocation4 + %s64]]
    %s82 = scalar_lea.sflag [#allocation2], %s80
    %s83 = smul.u32 1, 2
    %s84 = sshll.u32 %s83, 4
    %85 = dma.done %s82, %s84
    %s86 = sadd.s32 %s64, 8
    %p87 = scmp.lt.s32.totalorder %s86, 16
    // Predicated region
    $region16: #{tpu_custom_call.1} parent=12 // pred_check
      %p88 = pneg %p87
    $region17: #{tpu_custom_call.1} parent=12 // pred_check_branch
      %90 = sbr.rel (%p88) target = $region19
    $region18: #{tpu_custom_call.1} parent=12 // pred_region
      #allocation8 [shape = 'u32[3]{0}', space=smem, size = 0xc, scoped, tag = 'DMA stride descriptor']
      %s91 = sld [smem:[#allocation4 + %s86]]
      %s92 = sshrl.u32 %s91, 3
      %s93 = sand.u32 %s91, 7
      %s94 = smul.u32 %s92, 16
      %s95 = sadd.s32 %s93, %s94
      %s96 = scalar_lea.hbm %s1, %s95
      %s97 = sshrl.u32 %s86, 3
      %s98 = sand.u32 %s86, 7
      %s99 = smul.u32 %s97, 16
      %s100 = sadd.s32 %s98, %s99
      %s101 = scalar_lea.hbm %s2, %s100
      %s103 = sshll.u32 1, 14
      %s104 = sxor.u32 4294967295, %s103
      %s106 = sshll.u32 %s96, 4
      %s107 = int_to_ptr.hbm [resolvable:$true] %s106
      %s108 = sshll.u32 %s101, 4
      %s109 = int_to_ptr.hbm [resolvable:$true] %s108
      %113 = sst [smem:[#allocation8]] 128
      %s114 = scalar_lea.smem [#allocation8], 1
      %115 = sst [smem:[%s114]] 128
      %s116 = scalar_lea.smem [#allocation8], 2
      %117 = sst [smem:[%s116]] 1
      %119 = dma.general %s107, 32, %s109, %s82, [#allocation7], [#allocation8], 0, 0
    $region19: #{tpu_custom_call.1} parent=12 // pred_fallthru
      _
  $region13: #{tpu_custom_call.1} parent=0 // loop_footer
    %s68 = sadd.s32 1, %s64
  $region14: #{tpu_custom_call.1} parent=0 // loop_footer_branch
    %63 = sbr.rel target = $region10
  $region15: #{tpu_custom_call.1} parent=0 // loop_exit
    _
  %120 = vsyncmov [#allocation2]
  %s121 = vpop.sfrf %120
  %p122 = scmp.eq.s32.totalorder %s121, 0
  %p123 = pneg %p122
  %125 = shalt.err (%p123)
  %s126 = scalar_lea.sflag [#allocation2], 1
  %127 = vsyncmov %s126
  %s128 = vpop.sfrf %127
  %p129 = scmp.eq.s32.totalorder %s128, 0
  %p130 = pneg %p129
  %132 = shalt.err (%p130)
  %s133 = scalar_lea.sflag [#allocation2], 2
  %134 = vsyncmov %s133
  %s135 = vpop.sfrf %134
  %p136 = scmp.eq.s32.totalorder %s135, 0
  %p137 = pneg %p136
  %139 = shalt.err (%p137)
  %s140 = scalar_lea.sflag [#allocation2], 3
  %141 = vsyncmov %s140
  %s142 = vpop.sfrf %141
  %p143 = scmp.eq.s32.totalorder %s142, 0
  %p144 = pneg %p143
  %146 = shalt.err (%p144)
  %s147 = scalar_lea.sflag [#allocation2], 4
  %148 = vsyncmov %s147
  %s149 = vpop.sfrf %148
  %p150 = scmp.eq.s32.totalorder %s149, 0
  %p151 = pneg %p150
  %153 = shalt.err (%p151)
  %s154 = scalar_lea.sflag [#allocation2], 5
  %155 = vsyncmov %s154
  %s156 = vpop.sfrf %155
  %p157 = scmp.eq.s32.totalorder %s156, 0
  %p158 = pneg %p157
  %160 = shalt.err (%p158)
  %s161 = scalar_lea.sflag [#allocation2], 6
  %162 = vsyncmov %s161
  %s163 = vpop.sfrf %162
  %p164 = scmp.eq.s32.totalorder %s163, 0
  %p165 = pneg %p164
  %167 = shalt.err (%p165)
  %s168 = scalar_lea.sflag [#allocation2], 7
  %169 = vsyncmov %s168
  %s170 = vpop.sfrf %169
  %p171 = scmp.eq.s32.totalorder %s170, 0
  %p172 = pneg %p171
  %174 = shalt.err (%p172)

</llo_original>
